<compile_context>
chip_gen: v7x
topology: tpu7x:2x2x1
jax: 0.10.0
libtpu: 0.0.40
codegen_flags: <defaults>
</compile_context>

<pallas_src>
from functools import partial

import jax
import jax.numpy as jnp
from jax.experimental import pallas as pl
from jax.experimental.pallas import tpu as pltpu


def _round_up(x, m):
    return (x + m - 1) // m * m


# --------------------------------------------------------------------------
# Frozen feature extractor (resnet18 conv1/bn1/relu/maxpool/layer1/avgpool).
# Runs "no_grad" with frozen (here: synthetic deterministic) weights.
# TODO(synk): frozen backbone convs + bilinear resize left in plain JAX
# (lax.conv / jax.image.resize); only the MoE head is a Pallas kernel.
# --------------------------------------------------------------------------
def conv2d(x, w, stride, pad):
    return jax.lax.conv_general_dilated(
        x, w, (stride, stride), [(pad, pad), (pad, pad)],
        dimension_numbers=("NCHW", "OIHW", "NCHW"))


def batchnorm(x, gamma, beta, mean, var, eps=1e-5):
    inv = jax.lax.rsqrt(var + eps) * gamma
    return x * inv[None, :, None, None] + (beta - mean * inv)[None, :, None, None]


def maxpool3x3s2(x):
    return jax.lax.reduce_window(
        x, -jnp.inf, jax.lax.max,
        window_dimensions=(1, 1, 3, 3), window_strides=(1, 1, 2, 2),
        padding=[(0, 0), (0, 0), (1, 1), (1, 1)])


def backbone(x, p):
    x = conv2d(x, p["conv1_w"], stride=2, pad=3)
    x = jax.nn.relu(batchnorm(x, *p["bn1"]))
    x = maxpool3x3s2(x)
    for blk in ("block1", "block2"):
        w1, bn1p, w2, bn2p = p[blk]
        idn = x
        y = jax.nn.relu(batchnorm(conv2d(x, w1, 1, 1), *bn1p))
        y = batchnorm(conv2d(y, w2, 1, 1), *bn2p)
        x = jax.nn.relu(y + idn)
    # AdaptiveAvgPool2d((1,1)) + Flatten -> [B, 64]
    return jnp.mean(x, axis=(2, 3))


# --------------------------------------------------------------------------
# Pallas MoE kernel: one fused MXU pass (gate + all experts), softmax, top-k,
# gated combine via vreg-aligned lane slots, lane-dense [TB, O_pad] store.
# --------------------------------------------------------------------------
def _moe_kernel(feat_ref, w_ref, b_ref, out_ref, *, num_experts, o_pad, k):
    E = num_experts
    feat = feat_ref[...]                                             # [TB, H_pad]

    # One lane-dense MXU matmul computes all expert outputs AND gate logits.
    fused = jnp.dot(feat, w_ref[...], preferred_element_type=jnp.float32)
    fused = fused + b_ref[...]                                       # [TB, N_pad]
    logits = fused[:, E * o_pad:E * o_pad + E]                       # [TB, E]

    # --- softmax (dim=1); approx reciprocal uses the idle EUP slot. The
    # uniform per-row scale error cancels in the top-k renormalization. ---
    m = jnp.max(logits, axis=1, keepdims=True)
    e_x = jnp.exp(logits - m)
    probs = e_x * pl.reciprocal(jnp.sum(e_x, axis=1, keepdims=True), approx=True)

    TB = probs.shape[0]
    col = jax.lax.broadcasted_iota(jnp.int32, (TB, E), 1)

    # --- iterative top-k (ties -> lowest index, matching torch.topk) ---
    remaining = probs
    gates_unnorm = jnp.zeros_like(probs)
    for _ in range(k):
        cur_max = jnp.max(remaining, axis=1, keepdims=True)
        is_max = remaining >= cur_max
        first_idx = jnp.min(jnp.where(is_max, col, E), axis=1, keepdims=True)
        sel = col == first_idx
        gates_unnorm = jnp.where(sel, probs, gates_unnorm)
        remaining = jnp.where(sel, -jnp.inf, remaining)

    denom = jnp.sum(gates_unnorm, axis=1, keepdims=True) + 1e-6
    gates = gates_unnorm / denom                                     # [TB, E] exact

    # --- gated combine: each expert slot is a whole-vreg (128-lane aligned)
    # static slice -> pure broadcast FMAs, no masked lane selects, no
    # cross-lane reductions (== SparseDispatcher dispatch/combine). ---
    acc = gates[:, 0:1] * fused[:, 0:o_pad]
    for e in range(1, E):
        acc = acc + gates[:, e:e + 1] * fused[:, e * o_pad:(e + 1) * o_pad]
    out_ref[...] = acc                                               # [TB, O_pad]


def moe_pallas(feat, w_gate, b_gate, w_experts, b_experts, k, *, batch_tile=128):
    B, H = feat.shape
    E, _, O = w_experts.shape

    # --- fused weight packing: lanes [e*O_pad, e*O_pad+O) = expert e weights
    # (each expert owns a full 128-lane-aligned slot), then a 128-lane gate
    # slot whose first E lanes are the gate weights; total padded to a
    # multiple of 256 lanes for the MXU. ---
    H_pad = _round_up(H, 128)
    O_pad = _round_up(O, 128)
    GATE_SLOT = 128
    width = E * O_pad + GATE_SLOT
    N_pad = _round_up(width, 256)

    w_exp = jnp.transpose(w_experts, (1, 0, 2))                      # [H, E, O]
    w_exp = jnp.pad(w_exp, ((0, 0), (0, 0), (0, O_pad - O)))         # [H, E, O_pad]
    w_exp = w_exp.reshape(H, E * O_pad)
    w_g = jnp.pad(w_gate, ((0, 0), (0, GATE_SLOT - E)))              # [H, 128]
    w_fused = jnp.concatenate([w_exp, w_g], axis=1)                  # [H, width]
    w_fused = jnp.pad(w_fused, ((0, H_pad - H), (0, N_pad - width)))

    b_exp = jnp.pad(b_experts, ((0, 0), (0, O_pad - O))).reshape(E * O_pad)
    b_g = jnp.pad(b_gate, (0, GATE_SLOT - E))
    b_fused = jnp.concatenate([b_exp, b_g])
    b_fused = jnp.pad(b_fused, (0, N_pad - width)).reshape(1, N_pad)

    # --- batch padding / tiling: at least 8 sublane rows per MXU pass. ---
    TB = min(batch_tile, _round_up(max(B, 8), 8))
    B_pad = _round_up(max(B, TB), TB)
    feat_p = jnp.pad(feat, ((0, B_pad - B), (0, H_pad - H)))

    kernel = partial(_moe_kernel, num_experts=E, o_pad=O_pad, k=k)
    out = pl.pallas_call(
        kernel,
        out_shape=jax.ShapeDtypeStruct((B_pad, O_pad), jnp.float32),
        grid_spec=pltpu.PrefetchScalarGridSpec(
            num_scalar_prefetch=0,
            grid=(B_pad // TB,),
            in_specs=[
                pl.BlockSpec((TB, H_pad), lambda i: (i, 0)),     # feat tile
                pl.BlockSpec((H_pad, N_pad), lambda i: (0, 0)),  # fused weights (resident)
                pl.BlockSpec((1, N_pad), lambda i: (0, 0)),      # fused bias (resident)
            ],
            out_specs=pl.BlockSpec((TB, O_pad), lambda i: (i, 0)),
        ),
        compiler_params=pltpu.CompilerParams(
            dimension_semantics=("parallel",)),
    )(feat_p, w_fused, b_fused)
    return out[:B, :O]


# --------------------------------------------------------------------------
# Pure-JAX reference of the MoE head (correctness check).
# --------------------------------------------------------------------------
def moe_ref(feat, w_gate, b_gate, w_experts, b_experts, k):
    logits = feat @ w_gate + b_gate
    probs = jax.nn.softmax(logits, axis=1)
    top_vals, top_idx = jax.lax.top_k(probs, k)
    top_gates = top_vals / (jnp.sum(top_vals, axis=1, keepdims=True) + 1e-6)
    gates = jnp.zeros_like(probs)
    gates = gates.at[jnp.arange(feat.shape[0])[:, None], top_idx].set(top_gates)
    expert_out = jnp.einsum("bh,eho->beo", feat, w_experts) + b_experts[None, :, :]
    return jnp.einsum("be,beo->bo", gates, expert_out)


# --------------------------------------------------------------------------
# Deterministic parameter construction + driver.
# --------------------------------------------------------------------------
def make_bn(c):
    return (jnp.ones((c,), jnp.float32), jnp.zeros((c,), jnp.float32),
            jnp.zeros((c,), jnp.float32), jnp.ones((c,), jnp.float32))


if __name__ == "__main__":
    key = jax.random.PRNGKey(0)
    ks = jax.random.split(key, 16)

    # Small input consistent with the module (resnet18 stem expects 3 channels).
    B, C, Hin, Win = 2, 3, 16, 16
    HID = 64               # gate_input_size
    E, OUT, K = 4, 32, 2   # num_experts, output_size, k  (noisy_gating=False)

    x = jax.random.normal(ks[0], (B, C, Hin, Win), jnp.float32)

    # Frozen backbone params (deterministic synthetic "pretrained" weights).
    backbone_params = {
        "conv1_w": jax.random.normal(ks[1], (64, 3, 7, 7), jnp.float32) * 0.05,
        "bn1": make_bn(64),
        "block1": (jax.random.normal(ks[2], (64, 64, 3, 3), jnp.float32) * 0.05,
                   make_bn(64),
                   jax.random.normal(ks[3], (64, 64, 3, 3), jnp.float32) * 0.05,
                   make_bn(64)),
        "block2": (jax.random.normal(ks[4], (64, 64, 3, 3), jnp.float32) * 0.05,
                   make_bn(64),
                   jax.random.normal(ks[5], (64, 64, 3, 3), jnp.float32) * 0.05,
                   make_bn(64)),
    }

    # MoE head params (nn.Linear weights, stored pre-transposed as [in, out]).
    w_gate = jax.random.normal(ks[6], (HID, E), jnp.float32) * 0.1
    b_gate = jax.random.normal(ks[7], (E,), jnp.float32) * 0.1
    w_experts = jax.random.normal(ks[8], (E, HID, OUT), jnp.float32) * 0.1
    b_experts = jax.random.normal(ks[9], (E, OUT), jnp.float32) * 0.1

    # forward: bilinear resize to 224x224 (align_corners=False == half-pixel),
    # frozen feature extractor, then the fused Pallas MoE kernel.
    x224 = jax.image.resize(x, (B, C, 224, 224), method="bilinear")
    feat = backbone(x224, backbone_params)            # [B, 64]

    y = moe_pallas(feat, w_gate, b_gate, w_experts, b_experts, K)
    y = jax.block_until_ready(y)

    y_ref = moe_ref(feat, w_gate, b_gate, w_experts, b_experts, K)
    assert y.shape == (B, OUT) and y.dtype == jnp.float32
    assert jnp.allclose(y, y_ref, atol=1e-4, rtol=1e-4), "mismatch vs reference"

    print("KERNEL_OK")
</pallas_src>

<mosaic_0001>
module attributes {stable_mosaic.version = 11 : i64} {
  func.func @_moe_kernel(%arg0: i32, %arg1: memref<8x128xf32, #tpu.memory_space<vmem>>, %arg2: memref<128x768xf32, #tpu.memory_space<vmem>>, %arg3: memref<1x768xf32, #tpu.memory_space<vmem>>, %arg4: memref<8x128xf32, #tpu.memory_space<vmem>>) attributes {dimension_semantics = [#tpu.dimension_semantics<parallel>], iteration_bounds = array<i64: 1>, scalar_prefetch = 0 : i64, scratch_operands = 0 : i64, tpu.core_type = #tpu.core_type<tc>, window_params = [{transform_indices = @transform_0, window_bounds = array<i64: 8, 128>}, {pipeline_mode = #tpu.pipeline_mode<synchronous>, transform_indices = @transform_1, window_bounds = array<i64: 128, 768>}, {pipeline_mode = #tpu.pipeline_mode<synchronous>, transform_indices = @transform_2, window_bounds = array<i64: 1, 768>}, {transform_indices = @transform_3, window_bounds = array<i64: 8, 128>}]} {
    %c0 = arith.constant 0 : index
    %c0_0 = arith.constant 0 : index
    %0 = vector.load %arg1[%c0, %c0_0] : memref<8x128xf32, #tpu.memory_space<vmem>>, vector<8x128xf32>
    %c0_1 = arith.constant 0 : index
    %c0_2 = arith.constant 0 : index
    %1 = vector.load %arg2[%c0_1, %c0_2] : memref<128x768xf32, #tpu.memory_space<vmem>>, vector<128x768xf32>
    %cst = arith.constant dense<0.000000e+00> : vector<8x768xf32>
    %2 = tpu.matmul %0, %1, %cst {dimension_numbers = #tpu.dot_dimension_numbers<[1], [0], [0], [1], [0, 0, 1, 1], [], []>} : vector<8x128xf32>, vector<128x768xf32>, vector<8x768xf32> -> vector<8x768xf32>
    %c0_3 = arith.constant 0 : index
    %c0_4 = arith.constant 0 : index
    %3 = vector.load %arg3[%c0_3, %c0_4] : memref<1x768xf32, #tpu.memory_space<vmem>>, vector<1x768xf32>
    %4 = vector.broadcast %3 : vector<1x768xf32> to vector<8x768xf32>
    %5 = arith.addf %2, %4 : vector<8x768xf32>
    %6 = vector.extract_strided_slice %5 {offsets = [0, 512], sizes = [8, 4], strides = [1, 1]} : vector<8x768xf32> to vector<8x4xf32>
    %cst_5 = arith.constant dense<0xFF800000> : vector<8xf32>
    %7 = vector.multi_reduction <maximumf>, %6, %cst_5 [1] : vector<8x4xf32> to vector<8xf32>
    %8 = vector.shape_cast %7 : vector<8xf32> to vector<8x1xf32>
    %9 = vector.broadcast %8 : vector<8x1xf32> to vector<8x4xf32>
    %10 = arith.subf %6, %9 : vector<8x4xf32>
    %11 = math.exp %10 : vector<8x4xf32>
    %cst_6 = arith.constant dense<0.000000e+00> : vector<8xf32>
    %12 = vector.multi_reduction <add>, %11, %cst_6 [1] : vector<8x4xf32> to vector<8xf32>
    %13 = vector.shape_cast %12 : vector<8xf32> to vector<8x1xf32>
    %14 = tpu.reciprocal %13 {approx = true} : vector<8x1xf32> -> vector<8x1xf32>
    %15 = vector.broadcast %14 : vector<8x1xf32> to vector<8x4xf32>
    %16 = arith.mulf %11, %15 : vector<8x4xf32>
    %17 = tpu.iota {dimensions = array<i32: 1>} : vector<8x4xi32>
    %cst_7 = arith.constant 0.000000e+00 : f32
    %18 = vector.broadcast %cst_7 : f32 to vector<8x4xf32>
    %cst_8 = arith.constant dense<0xFF800000> : vector<8xf32>
    %19 = vector.multi_reduction <maximumf>, %16, %cst_8 [1] : vector<8x4xf32> to vector<8xf32>
    %20 = vector.shape_cast %19 : vector<8xf32> to vector<8x1xf32>
    %21 = vector.broadcast %20 : vector<8x1xf32> to vector<8x4xf32>
    %22 = arith.cmpf oge, %16, %21 : vector<8x4xf32>
    %c4_i32 = arith.constant 4 : i32
    %23 = vector.broadcast %c4_i32 : i32 to vector<8x4xi32>
    %24 = arith.select %22, %17, %23 : vector<8x4xi1>, vector<8x4xi32>
    %cst_9 = arith.constant dense<2147483647> : vector<8xi32>
    %25 = vector.multi_reduction <minsi>, %24, %cst_9 [1] : vector<8x4xi32> to vector<8xi32>
    %26 = vector.shape_cast %25 : vector<8xi32> to vector<8x1xi32>
    %27 = vector.broadcast %26 : vector<8x1xi32> to vector<8x4xi32>
    %28 = arith.cmpi eq, %17, %27 : vector<8x4xi32>
    %29 = arith.select %28, %16, %18 : vector<8x4xi1>, vector<8x4xf32>
    %cst_10 = arith.constant 0xFF800000 : f32
    %30 = vector.broadcast %cst_10 : f32 to vector<8x4xf32>
    %31 = arith.select %28, %30, %16 : vector<8x4xi1>, vector<8x4xf32>
    %cst_11 = arith.constant dense<0xFF800000> : vector<8xf32>
    %32 = vector.multi_reduction <maximumf>, %31, %cst_11 [1] : vector<8x4xf32> to vector<8xf32>
    %33 = vector.shape_cast %32 : vector<8xf32> to vector<8x1xf32>
    %34 = vector.broadcast %33 : vector<8x1xf32> to vector<8x4xf32>
    %35 = arith.cmpf oge, %31, %34 : vector<8x4xf32>
    %c4_i32_12 = arith.constant 4 : i32
    %36 = vector.broadcast %c4_i32_12 : i32 to vector<8x4xi32>
    %37 = arith.select %35, %17, %36 : vector<8x4xi1>, vector<8x4xi32>
    %cst_13 = arith.constant dense<2147483647> : vector<8xi32>
    %38 = vector.multi_reduction <minsi>, %37, %cst_13 [1] : vector<8x4xi32> to vector<8xi32>
    %39 = vector.shape_cast %38 : vector<8xi32> to vector<8x1xi32>
    %40 = vector.broadcast %39 : vector<8x1xi32> to vector<8x4xi32>
    %41 = arith.cmpi eq, %17, %40 : vector<8x4xi32>
    %42 = arith.select %41, %16, %29 : vector<8x4xi1>, vector<8x4xf32>
    %cst_14 = arith.constant dense<0.000000e+00> : vector<8xf32>
    %43 = vector.multi_reduction <add>, %42, %cst_14 [1] : vector<8x4xf32> to vector<8xf32>
    %44 = vector.shape_cast %43 : vector<8xf32> to vector<8x1xf32>
    %cst_15 = arith.constant 9.99999997E-7 : f32
    %45 = vector.broadcast %cst_15 : f32 to vector<8x1xf32>
    %46 = arith.addf %44, %45 : vector<8x1xf32>
    %47 = vector.broadcast %46 : vector<8x1xf32> to vector<8x4xf32>
    %48 = arith.divf %42, %47 : vector<8x4xf32>
    %49 = vector.extract_strided_slice %48 {offsets = [0, 0], sizes = [8, 1], strides = [1, 1]} : vector<8x4xf32> to vector<8x1xf32>
    %50 = vector.extract_strided_slice %5 {offsets = [0, 0], sizes = [8, 128], strides = [1, 1]} : vector<8x768xf32> to vector<8x128xf32>
    %51 = vector.broadcast %49 : vector<8x1xf32> to vector<8x128xf32>
    %52 = arith.mulf %51, %50 : vector<8x128xf32>
    %53 = vector.extract_strided_slice %48 {offsets = [0, 1], sizes = [8, 1], strides = [1, 1]} : vector<8x4xf32> to vector<8x1xf32>
    %54 = vector.extract_strided_slice %5 {offsets = [0, 128], sizes = [8, 128], strides = [1, 1]} : vector<8x768xf32> to vector<8x128xf32>
    %55 = vector.broadcast %53 : vector<8x1xf32> to vector<8x128xf32>
    %56 = arith.mulf %55, %54 : vector<8x128xf32>
    %57 = arith.addf %52, %56 : vector<8x128xf32>
    %58 = vector.extract_strided_slice %48 {offsets = [0, 2], sizes = [8, 1], strides = [1, 1]} : vector<8x4xf32> to vector<8x1xf32>
    %59 = vector.extract_strided_slice %5 {offsets = [0, 256], sizes = [8, 128], strides = [1, 1]} : vector<8x768xf32> to vector<8x128xf32>
    %60 = vector.broadcast %58 : vector<8x1xf32> to vector<8x128xf32>
    %61 = arith.mulf %60, %59 : vector<8x128xf32>
    %62 = arith.addf %57, %61 : vector<8x128xf32>
    %63 = vector.extract_strided_slice %48 {offsets = [0, 3], sizes = [8, 1], strides = [1, 1]} : vector<8x4xf32> to vector<8x1xf32>
    %64 = vector.extract_strided_slice %5 {offsets = [0, 384], sizes = [8, 128], strides = [1, 1]} : vector<8x768xf32> to vector<8x128xf32>
    %65 = vector.broadcast %63 : vector<8x1xf32> to vector<8x128xf32>
    %66 = arith.mulf %65, %64 : vector<8x128xf32>
    %67 = arith.addf %62, %66 : vector<8x128xf32>
    %c0_16 = arith.constant 0 : index
    %c0_17 = arith.constant 0 : index
    %68 = vector.load %arg4[%c0_16, %c0_17] : memref<8x128xf32, #tpu.memory_space<vmem>>, vector<8x128xf32>
    tpu.vector_store %arg4[%c0_16, %c0_17], %67 {strides = array<i32>} : memref<8x128xf32, #tpu.memory_space<vmem>>, vector<8x128xf32>,
    return
  }
  func.func @transform_0(%arg0: i32) -> (i32, i32) {
    %c0_i32 = arith.constant 0 : i32
    %c0_i32_0 = arith.constant 0 : i32
    return %arg0, %c0_i32 : i32, i32
  }
  func.func @transform_1(%arg0: i32) -> (i32, i32) {
    %c0_i32 = arith.constant 0 : i32
    %c0_i32_0 = arith.constant 0 : i32
    %c0_i32_1 = arith.constant 0 : i32
    return %c0_i32, %c0_i32_0 : i32, i32
  }
  func.func @transform_2(%arg0: i32) -> (i32, i32) {
    %c0_i32 = arith.constant 0 : i32
    %c0_i32_0 = arith.constant 0 : i32
    %c0_i32_1 = arith.constant 0 : i32
    return %c0_i32, %c0_i32_0 : i32, i32
  }
  func.func @transform_3(%arg0: i32) -> (i32, i32) {
    %c0_i32 = arith.constant 0 : i32
    %c0_i32_0 = arith.constant 0 : i32
    return %arg0, %c0_i32 : i32, i32
  }
}

</mosaic_0001>

<llo_original>
// kernel: tpu_custom_call.1
$region0: #{tpu_custom_call.1}
  #allocation0 [shape = 'u32[]', space=smem, size = 0x4, offset = 0x4, fixed_abs, tag = 'smem constant byte address 0x4 - core index']
  #allocation1 [shape = 'u32[144,128]{1,0:T(1,128)}', space=vmem, size = 0x12000, scoped, tag = 'internal scratch']
  %s0 = inlined_call_operand.hbm [shape: f32[8,128], index: 0, kind: input, shape index: {}]
  %s1 = inlined_call_operand.hbm [shape: f32[128,768], index: 1, kind: input, shape index: {}]
  %s2 = inlined_call_operand.vmem [shape: f32[1,768], index: 2, kind: input, shape index: {}]
  %s3 = inlined_call_operand.hbm [shape: f32[8,128], index: 3, kind: output, shape index: {}]
  %s4 = sld [smem:[#allocation0]]
  $region30: #{tpu_custom_call.1} parent=0
    _
  %s6 = ssub.s32 1, %s4
  %s7 = scalar_select 0, %s6, %s4
  $region1: #{tpu_custom_call.1} parent=0
    #allocation2 [shape = 'u8[4096]{0}', space=vmem, size = 0x1000, scoped, tag = 'input window, operand 0, single buffered']
    #allocation3 [shape = 's32[1]{0}', space=sflag, size = 0x4, scoped, tag = 'scoped memory for tpu_custom_call.1']
    #allocation4 [shape = 's32[1]{0}', space=sflag, size = 0x4, scoped, tag = 'scoped memory for tpu_custom_call.1']
    #allocation5 [shape = 'u8[393216]{0}', space=vmem, size = 0x60000, scoped, tag = 'input window, operand 1, single buffered']
    #allocation6 [shape = 's32[1]{0}', space=sflag, size = 0x4, scoped, tag = 'scoped memory for tpu_custom_call.1']
    #allocation7 [shape = 'u8[4096]{0}', space=vmem, size = 0x1000, scoped, tag = 'output window, operand 0, single buffered']
    %8 = vsyncpa [#allocation3], 0
    %9 = vsyncpa [#allocation6], 0
    %10 = vsyncpa [#allocation4], 0
    // Predicated region
    $region2: #{tpu_custom_call.1} parent=1 // pred_check
      _
    $region3: #{tpu_custom_call.1} parent=1 // pred_check_branch
      %12 = sbr.rel (0) target = $region5
    $region4: #{tpu_custom_call.1} parent=1 // pred_region
      %s14 = ssub.s32 128, 128
      %15 = vsyncadd [#allocation3], %s14
      %s17 = sshll.u32 [#allocation2], 4
      %s18 = int_to_ptr.vmem [resolvable:$true] %s17
      %20 = dma.hbm_to_vmem [thread:$0]  %s0, 128, %s18, [#allocation3]
    $region5: #{tpu_custom_call.1} parent=1 // pred_fallthru
      _
    // Predicated region
    $region6: #{tpu_custom_call.1} parent=1 // pred_check
      _
    $region7: #{tpu_custom_call.1} parent=1 // pred_check_branch
      %22 = sbr.rel (0) target = $region9
    $region8: #{tpu_custom_call.1} parent=1 // pred_region
      %s24 = ssub.s32 12288, 12288
      %25 = vsyncadd [#allocation6], %s24
      %s26 = sshll.u32 [#allocation5], 4
      %s27 = int_to_ptr.vmem [resolvable:$true] %s26
      %32 = dma.hbm_to_vmem [thread:$0]  %s1, 12288, %s27, [#allocation6], 768, 768, 48
    $region9: #{tpu_custom_call.1} parent=1 // pred_fallthru
      _
    // Predicated region
    $region10: #{tpu_custom_call.1} parent=1 // pred_check
      _
    $region11: #{tpu_custom_call.1} parent=1 // pred_check_branch
      %34 = sbr.rel (0) target = $region13
    $region12: #{tpu_custom_call.1} parent=1 // pred_region
      _
    $region13: #{tpu_custom_call.1} parent=1 // pred_fallthru
      _
    // Predicated region
    $region14: #{tpu_custom_call.1} parent=1 // pred_check
      _
    $region15: #{tpu_custom_call.1} parent=1 // pred_check_branch
      %36 = sbr.rel (0) target = $region17
    $region16: #{tpu_custom_call.1} parent=1 // pred_region
      %37 = dma.done [#allocation3], 128
    $region17: #{tpu_custom_call.1} parent=1 // pred_fallthru
      _
    // Predicated region
    $region18: #{tpu_custom_call.1} parent=1 // pred_check
      _
    $region19: #{tpu_custom_call.1} parent=1 // pred_check_branch
      %39 = sbr.rel (0) target = $region21
    $region20: #{tpu_custom_call.1} parent=1 // pred_region
      %40 = dma.done [#allocation6], 12288
    $region21: #{tpu_custom_call.1} parent=1 // pred_fallthru
      _
    %v41 = vld [vmem:[#allocation2] sm:$0xff]
    %v42 = vld [vmem:[#allocation5] sm:$0xff]
    %v43 = vld [vmem:[#allocation5 + $0x8] sm:$0xff]
    %v44 = vld [vmem:[#allocation5 + $0x10] sm:$0xff]
    %v45 = vld [vmem:[#allocation5 + $0x18] sm:$0xff]
    %v46 = vld [vmem:[#allocation5 + $0x20] sm:$0xff]
    %v47 = vld [vmem:[#allocation5 + $0x28] sm:$0xff]
    %v48 = vld [vmem:[#allocation5 + $0x30] sm:$0xff]
    %v49 = vld [vmem:[#allocation5 + $0x38] sm:$0xff]
    %v50 = vld [vmem:[#allocation5 + $0x40] sm:$0xff]
    %v51 = vld [vmem:[#allocation5 + $0x48] sm:$0xff]
    %v52 = vld [vmem:[#allocation5 + $0x50] sm:$0xff]
    %v53 = vld [vmem:[#allocation5 + $0x58] sm:$0xff]
    %v54 = vld [vmem:[#allocation5 + $0x60] sm:$0xff]
    %v55 = vld [vmem:[#allocation5 + $0x68] sm:$0xff]
    %v56 = vld [vmem:[#allocation5 + $0x70] sm:$0xff]
    %v57 = vld [vmem:[#allocation5 + $0x78] sm:$0xff]
    %v58 = vld [vmem:[#allocation5 + $0x80] sm:$0xff]
    %v59 = vld [vmem:[#allocation5 + $0x88] sm:$0xff]
    %v60 = vld [vmem:[#allocation5 + $0x90] sm:$0xff]
    %v61 = vld [vmem:[#allocation5 + $0x98] sm:$0xff]
    %v62 = vld [vmem:[#allocation5 + $0xa0] sm:$0xff]
    %v63 = vld [vmem:[#allocation5 + $0xa8] sm:$0xff]
    %v64 = vld [vmem:[#allocation5 + $0xb0] sm:$0xff]
    %v65 = vld [vmem:[#allocation5 + $0xb8] sm:$0xff]
    %v66 = vld [vmem:[#allocation5 + $0xc0] sm:$0xff]
    %v67 = vld [vmem:[#allocation5 + $0xc8] sm:$0xff]
    %v68 = vld [vmem:[#allocation5 + $0xd0] sm:$0xff]
    %v69 = vld [vmem:[#allocation5 + $0xd8] sm:$0xff]
    %v70 = vld [vmem:[#allocation5 + $0xe0] sm:$0xff]
    %v71 = vld [vmem:[#allocation5 + $0xe8] sm:$0xff]
    %v72 = vld [vmem:[#allocation5 + $0xf0] sm:$0xff]
    %v73 = vld [vmem:[#allocation5 + $0xf8] sm:$0xff]
    %v74 = vld [vmem:[#allocation5 + $0x100] sm:$0xff]
    %v75 = vld [vmem:[#allocation5 + $0x108] sm:$0xff]
    %v76 = vld [vmem:[#allocation5 + $0x110] sm:$0xff]
    %v77 = vld [vmem:[#allocation5 + $0x118] sm:$0xff]
    %v78 = vld [vmem:[#allocation5 + $0x120] sm:$0xff]
    %v79 = vld [vmem:[#allocation5 + $0x128] sm:$0xff]
    %v80 = vld [vmem:[#allocation5 + $0x130] sm:$0xff]
    %v81 = vld [vmem:[#allocation5 + $0x138] sm:$0xff]
    %v82 = vld [vmem:[#allocation5 + $0x140] sm:$0xff]
    %v83 = vld [vmem:[#allocation5 + $0x148] sm:$0xff]
    %v84 = vld [vmem:[#allocation5 + $0x150] sm:$0xff]
    %v85 = vld [vmem:[#allocation5 + $0x158] sm:$0xff]
    %v86 = vld [vmem:[#allocation5 + $0x160] sm:$0xff]
    %v87 = vld [vmem:[#allocation5 + $0x168] sm:$0xff]
    %v88 = vld [vmem:[#allocation5 + $0x170] sm:$0xff]
    %v89 = vld [vmem:[#allocation5 + $0x178] sm:$0xff]
    %v90 = vld [vmem:[#allocation5 + $0x180] sm:$0xff]
    %v91 = vld [vmem:[#allocation5 + $0x188] sm:$0xff]
    %v92 = vld [vmem:[#allocation5 + $0x190] sm:$0xff]
    %v93 = vld [vmem:[#allocation5 + $0x198] sm:$0xff]
    %v94 = vld [vmem:[#allocation5 + $0x1a0] sm:$0xff]
    %v95 = vld [vmem:[#allocation5 + $0x1a8] sm:$0xff]
    %v96 = vld [vmem:[#allocation5 + $0x1b0] sm:$0xff]
    %v97 = vld [vmem:[#allocation5 + $0x1b8] sm:$0xff]
    %v98 = vld [vmem:[#allocation5 + $0x1c0] sm:$0xff]
    %v99 = vld [vmem:[#allocation5 + $0x1c8] sm:$0xff]
    %v100 = vld [vmem:[#allocation5 + $0x1d0] sm:$0xff]
    %v101 = vld [vmem:[#allocation5 + $0x1d8] sm:$0xff]
    %v102 = vld [vmem:[#allocation5 + $0x1e0] sm:$0xff]
    %v103 = vld [vmem:[#allocation5 + $0x1e8] sm:$0xff]
    %v104 = vld [vmem:[#allocation5 + $0x1f0] sm:$0xff]
    %v105 = vld [vmem:[#allocation5 + $0x1f8] sm:$0xff]
    %v106 = vld [vmem:[#allocation5 + $0x200] sm:$0xff]
    %v107 = vld [vmem:[#allocation5 + $0x208] sm:$0xff]
    %v108 = vld [vmem:[#allocation5 + $0x210] sm:$0xff]
    %v109 = vld [vmem:[#allocation5 + $0x218] sm:$0xff]
    %v110 = vld [vmem:[#allocation5 + $0x220] sm:$0xff]
    %v111 = vld [vmem:[#allocation5 + $0x228] sm:$0xff]
    %v112 = vld [vmem:[#allocation5 + $0x230] sm:$0xff]
    %v113 = vld [vmem:[#allocation5 + $0x238] sm:$0xff]
    %v114 = vld [vmem:[#allocation5 + $0x240] sm:$0xff]
    %v115 = vld [vmem:[#allocation5 + $0x248] sm:$0xff]
    %v116 = vld [vmem:[#allocation5 + $0x250] sm:$0xff]
    %v117 = vld [vmem:[#allocation5 + $0x258] sm:$0xff]
    %v118 = vld [vmem:[#allocation5 + $0x260] sm:$0xff]
    %v119 = vld [vmem:[#allocation5 + $0x268] sm:$0xff]
    %v120 = vld [vmem:[#allocation5 + $0x270] sm:$0xff]
    %v121 = vld [vmem:[#allocation5 + $0x278] sm:$0xff]
    %v122 = vld [vmem:[#allocation5 + $0x280] sm:$0xff]
    %v123 = vld [vmem:[#allocation5 + $0x288] sm:$0xff]
    %v124 = vld [vmem:[#allocation5 + $0x290] sm:$0xff]
    %v125 = vld [vmem:[#allocation5 + $0x298] sm:$0xff]
    %v126 = vld [vmem:[#allocation5 + $0x2a0] sm:$0xff]
    %v127 = vld [vmem:[#allocation5 + $0x2a8] sm:$0xff]
    %v128 = vld [vmem:[#allocation5 + $0x2b0] sm:$0xff]
    %v129 = vld [vmem:[#allocation5 + $0x2b8] sm:$0xff]
    %v130 = vld [vmem:[#allocation5 + $0x2c0] sm:$0xff]
    %v131 = vld [vmem:[#allocation5 + $0x2c8] sm:$0xff]
    %v132 = vld [vmem:[#allocation5 + $0x2d0] sm:$0xff]
    %v133 = vld [vmem:[#allocation5 + $0x2d8] sm:$0xff]
    %v134 = vld [vmem:[#allocation5 + $0x2e0] sm:$0xff]
    %v135 = vld [vmem:[#allocation5 + $0x2e8] sm:$0xff]
    %v136 = vld [vmem:[#allocation5 + $0x2f0] sm:$0xff]
    %v137 = vld [vmem:[#allocation5 + $0x2f8] sm:$0xff]
    %v138 = vld [vmem:[%s2] sm:$0x3f]
    %v140 = vlaneseq
    %v141 = vshrl.u32 %v140, 7
    %v142 = vsub.s32 0, %v141
    %v143 = vrot.slane %v138, %v142
    %v144 = vlaneseq
    %v145 = vshrl.u32 %v144, 7
    %v146 = vsub.s32 1, %v145
    %v147 = vrot.slane %v138, %v146
    %v148 = vlaneseq
    %v149 = vshrl.u32 %v148, 7
    %v150 = vsub.s32 2, %v149
    %v151 = vrot.slane %v138, %v150
    %v152 = vlaneseq
    %v153 = vshrl.u32 %v152, 7
    %v154 = vsub.s32 3, %v153
    %v155 = vrot.slane %v138, %v154
    %v156 = vlaneseq
    %v157 = vshrl.u32 %v156, 7
    %v158 = vsub.s32 4, %v157
    %v159 = vrot.slane %v138, %v158
    %165 = vmatprep.subr.mxu0 %v43
    %166 = vmatpush1.msra.mxu0 %v42
    %167 = vmatprep.subr.mxu0 %v49
    %168 = vmatpush1.msra.mxu0 %v48
    %169 = vmatprep.subr.mxu0 %v55
    %170 = vmatpush1.msra.mxu0 %v54
    %171 = vmatprep.subr.mxu0 %v61
    %172 = vmatpush1.msra.mxu0 %v60
    %173 = vmatprep.subr.mxu0 %v67
    %174 = vmatpush1.msra.mxu0 %v66
    %175 = vmatprep.subr.mxu0 %v73
    %176 = vmatpush1.msra.mxu0 %v72
    %177 = vmatprep.subr.mxu0 %v79
    %178 = vmatpush1.msra.mxu0 %v78
    %179 = vmatprep.subr.mxu0 %v85
    %180 = vmatpush1.msra.mxu0 %v84
    %181 = vmatprep.subr.mxu0 %v91
    %182 = vmatpush1.msra.mxu0 %v90
    %183 = vmatprep.subr.mxu0 %v97
    %184 = vmatpush1.msra.mxu0 %v96
    %185 = vmatprep.subr.mxu0 %v103
    %186 = vmatpush1.msra.mxu0 %v102
    %187 = vmatprep.subr.mxu0 %v109
    %188 = vmatpush1.msra.mxu0 %v108
    %189 = vmatprep.subr.mxu0 %v115
    %190 = vmatpush1.msra.mxu0 %v114
    %191 = vmatprep.subr.mxu0 %v121
    %192 = vmatpush1.msra.mxu0 %v120
    %193 = vmatprep.subr.mxu0 %v127
    %194 = vmatpush1.msra.mxu0 %v126
    %195 = vmatprep.subr.mxu0 %v133
    %196 = vmatpush1.msra.mxu0 %v132
    %197 = vmatprep.subr.mxu0 0.0
    %198 = vmatpush1.msra.mxu0 0.0
    %199 = vmatprep.subr.mxu0 0.0
    %200 = vmatpush1.msra.mxu0 0.0
    %201 = vmatprep.subr.mxu0 0.0
    %202 = vmatpush1.msra.mxu0 0.0
    %203 = vmatprep.subr.mxu0 0.0
    %204 = vmatpush1.msra.mxu0 0.0
    %205 = vmatprep.subr.mxu0 0.0
    %206 = vmatpush1.msra.mxu0 0.0
    %207 = vmatprep.subr.mxu0 0.0
    %208 = vmatpush1.msra.mxu0 0.0
    %209 = vmatprep.subr.mxu0 0.0
    %210 = vmatpush1.msra.mxu0 0.0
    %211 = vmatprep.subr.mxu0 0.0
    %212 = vmatpush1.msra.mxu0 0.0
    %213 = vmatprep.subr.mxu0 0.0
    %214 = vmatpush1.msra.mxu0 0.0
    %215 = vmatprep.subr.mxu0 0.0
    %216 = vmatpush1.msra.mxu0 0.0
    %217 = vmatprep.subr.mxu0 0.0
    %218 = vmatpush1.msra.mxu0 0.0
    %219 = vmatprep.subr.mxu0 0.0
    %220 = vmatpush1.msra.mxu0 0.0
    %221 = vmatprep.subr.mxu0 0.0
    %222 = vmatpush1.msra.mxu0 0.0
    %223 = vmatprep.subr.mxu0 0.0
    %224 = vmatpush1.msra.mxu0 0.0
    %225 = vmatprep.subr.mxu0 0.0
    %226 = vmatpush1.msra.mxu0 0.0
    %227 = vmatprep.subr.mxu0 0.0
    %228 = vmatpush1.msra.mxu0 0.0
    %229 = vmatprep.mubr.f32.mxu0 0.0
    %230 = vmatmul.mubr.f32.gmra.mrb[0].mxu0 %v41
    %v231 = vpop.f32.mrb[0].mxu0
    %v232 = vadd.f32 %v143, %v231
    %v233 = vpop.f32.mrb[0].mxu0
    %v234 = vadd.f32 %v147, %v233
    %235 = vdwg.mxu0
    %236 = vmatprep.subr.mxu0 %v45
    %237 = vmatpush1.msra.mxu0 %v44
    %238 = vmatprep.subr.mxu0 %v51
    %239 = vmatpush1.msra.mxu0 %v50
    %240 = vmatprep.subr.mxu0 %v57
    %241 = vmatpush1.msra.mxu0 %v56
    %242 = vmatprep.subr.mxu0 %v63
    %243 = vmatpush1.msra.mxu0 %v62
    %244 = vmatprep.subr.mxu0 %v69
    %245 = vmatpush1.msra.mxu0 %v68
    %246 = vmatprep.subr.mxu0 %v75
    %247 = vmatpush1.msra.mxu0 %v74
    %248 = vmatprep.subr.mxu0 %v81
    %249 = vmatpush1.msra.mxu0 %v80
    %250 = vmatprep.subr.mxu0 %v87
    %251 = vmatpush1.msra.mxu0 %v86
    %252 = vmatprep.subr.mxu0 %v93
    %253 = vmatpush1.msra.mxu0 %v92
    %254 = vmatprep.subr.mxu0 %v99
    %255 = vmatpush1.msra.mxu0 %v98
    %256 = vmatprep.subr.mxu0 %v105
    %257 = vmatpush1.msra.mxu0 %v104
    %258 = vmatprep.subr.mxu0 %v111
    %259 = vmatpush1.msra.mxu0 %v110
    %260 = vmatprep.subr.mxu0 %v117
    %261 = vmatpush1.msra.mxu0 %v116
    %262 = vmatprep.subr.mxu0 %v123
    %263 = vmatpush1.msra.mxu0 %v122
    %264 = vmatprep.subr.mxu0 %v129
    %265 = vmatpush1.msra.mxu0 %v128
    %266 = vmatprep.subr.mxu0 %v135
    %267 = vmatpush1.msra.mxu0 %v134
    %268 = vmatprep.subr.mxu0 0.0
    %269 = vmatpush1.msra.mxu0 0.0
    %270 = vmatprep.subr.mxu0 0.0
    %271 = vmatpush1.msra.mxu0 0.0
    %272 = vmatprep.subr.mxu0 0.0
    %273 = vmatpush1.msra.mxu0 0.0
    %274 = vmatprep.subr.mxu0 0.0
    %275 = vmatpush1.msra.mxu0 0.0
    %276 = vmatprep.subr.mxu0 0.0
    %277 = vmatpush1.msra.mxu0 0.0
    %278 = vmatprep.subr.mxu0 0.0
    %279 = vmatpush1.msra.mxu0 0.0
    %280 = vmatprep.subr.mxu0 0.0
    %281 = vmatpush1.msra.mxu0 0.0
    %282 = vmatprep.subr.mxu0 0.0
    %283 = vmatpush1.msra.mxu0 0.0
    %284 = vmatprep.subr.mxu0 0.0
    %285 = vmatpush1.msra.mxu0 0.0
    %286 = vmatprep.subr.mxu0 0.0
    %287 = vmatpush1.msra.mxu0 0.0
    %288 = vmatprep.subr.mxu0 0.0
    %289 = vmatpush1.msra.mxu0 0.0
    %290 = vmatprep.subr.mxu0 0.0
    %291 = vmatpush1.msra.mxu0 0.0
    %292 = vmatprep.subr.mxu0 0.0
    %293 = vmatpush1.msra.mxu0 0.0
    %294 = vmatprep.subr.mxu0 0.0
    %295 = vmatpush1.msra.mxu0 0.0
    %296 = vmatprep.subr.mxu0 0.0
    %297 = vmatpush1.msra.mxu0 0.0
    %298 = vmatprep.subr.mxu0 0.0
    %299 = vmatpush1.msra.mxu0 0.0
    %300 = vmatprep.mubr.f32.mxu0 0.0
    %301 = vmatmul.mubr.f32.gmra.mrb[0].mxu0 %v41
    %v302 = vpop.f32.mrb[0].mxu0
    %v303 = vadd.f32 %v151, %v302
    %v304 = vpop.f32.mrb[0].mxu0
    %v305 = vadd.f32 %v155, %v304
    %306 = vdwg.mxu0
    %307 = vmatprep.subr.mxu0 %v47
    %308 = vmatpush1.msra.mxu0 %v46
    %309 = vmatprep.subr.mxu0 %v53
    %310 = vmatpush1.msra.mxu0 %v52
    %311 = vmatprep.subr.mxu0 %v59
    %312 = vmatpush1.msra.mxu0 %v58
    %313 = vmatprep.subr.mxu0 %v65
    %314 = vmatpush1.msra.mxu0 %v64
    %315 = vmatprep.subr.mxu0 %v71
    %316 = vmatpush1.msra.mxu0 %v70
    %317 = vmatprep.subr.mxu0 %v77
    %318 = vmatpush1.msra.mxu0 %v76
    %319 = vmatprep.subr.mxu0 %v83
    %320 = vmatpush1.msra.mxu0 %v82
    %321 = vmatprep.subr.mxu0 %v89
    %322 = vmatpush1.msra.mxu0 %v88
    %323 = vmatprep.subr.mxu0 %v95
    %324 = vmatpush1.msra.mxu0 %v94
    %325 = vmatprep.subr.mxu0 %v101
    %326 = vmatpush1.msra.mxu0 %v100
    %327 = vmatprep.subr.mxu0 %v107
    %328 = vmatpush1.msra.mxu0 %v106
    %329 = vmatprep.subr.mxu0 %v113
    %330 = vmatpush1.msra.mxu0 %v112
    %331 = vmatprep.subr.mxu0 %v119
    %332 = vmatpush1.msra.mxu0 %v118
    %333 = vmatprep.subr.mxu0 %v125
    %334 = vmatpush1.msra.mxu0 %v124
    %335 = vmatprep.subr.mxu0 %v131
    %336 = vmatpush1.msra.mxu0 %v130
    %337 = vmatprep.subr.mxu0 %v137
    %338 = vmatpush1.msra.mxu0 %v136
    %339 = vmatprep.subr.mxu0 0.0
    %340 = vmatpush1.msra.mxu0 0.0
    %341 = vmatprep.subr.mxu0 0.0
    %342 = vmatpush1.msra.mxu0 0.0
    %343 = vmatprep.subr.mxu0 0.0
    %344 = vmatpush1.msra.mxu0 0.0
    %345 = vmatprep.subr.mxu0 0.0
    %346 = vmatpush1.msra.mxu0 0.0
    %347 = vmatprep.subr.mxu0 0.0
    %348 = vmatpush1.msra.mxu0 0.0
    %349 = vmatprep.subr.mxu0 0.0
    %350 = vmatpush1.msra.mxu0 0.0
    %351 = vmatprep.subr.mxu0 0.0
    %352 = vmatpush1.msra.mxu0 0.0
    %353 = vmatprep.subr.mxu0 0.0
    %354 = vmatpush1.msra.mxu0 0.0
    %355 = vmatprep.subr.mxu0 0.0
    %356 = vmatpush1.msra.mxu0 0.0
    %357 = vmatprep.subr.mxu0 0.0
    %358 = vmatpush1.msra.mxu0 0.0
    %359 = vmatprep.subr.mxu0 0.0
    %360 = vmatpush1.msra.mxu0 0.0
    %361 = vmatprep.subr.mxu0 0.0
    %362 = vmatpush1.msra.mxu0 0.0
    %363 = vmatprep.subr.mxu0 0.0
    %364 = vmatpush1.msra.mxu0 0.0
    %365 = vmatprep.subr.mxu0 0.0
    %366 = vmatpush1.msra.mxu0 0.0
    %367 = vmatprep.subr.mxu0 0.0
    %368 = vmatpush1.msra.mxu0 0.0
    %369 = vmatprep.subr.mxu0 0.0
    %370 = vmatpush1.msra.mxu0 0.0
    %371 = vmatprep.mubr.f32.mxu0 0.0
    %372 = vmatmul.mubr.f32.gmra.mrb[0].mxu0 %v41
    %v373 = vpop.f32.mrb[0].mxu0
    %v374 = vadd.f32 %v159, %v373
    %v375 = vpop.f32.mrb[0].mxu0
    %376 = vdwg.mxu0
    %vm377 = vcmask 31744
    %v378 = vsel %vm377, %v374, -inf
    %379 = vmax.xlane.f32.xlu0 %v378
    %v380 = vpop.xlane.xlu0 %379
    %v381 = vsub.f32 %v374, %v380
    %v382 = vmul.f32 %v381, 1.442695
    %v383 = vpow.pop %v382
    %v384 = vsel %vm377, %v383, 0.0
    %385 = vadd.xlane.f32.xlu0 %v384
    %v386 = vpop.xlane.xlu0 %385
    %v387 = vrcp.pop %v386
    %v388 = vmul.f32 %v383, %v387
    %v389 = vlaneseq
    %v390 = vand.u32 %v389, 127
    %v391 = vsel %vm377, %v388, -inf
    %392 = vmax.xlane.f32.xlu0 %v391
    %v393 = vpop.xlane.xlu0 %392
    %vm394 = vcmp.ge.f32.partialorder %v388, %v393
    %v395 = vsel %vm394, %v390, 4
    %v396 = vsel %vm377, %v395, 2147483647
    %v397 = vand.u32 %v396, 65535
    %v398 = vshra.s32 %v396, 16
    %v399 = vcvt.s32.f32 %v397
    %v400 = vcvt.s32.f32 %v398
    %401 = vmin.xlane.f32.xlu0 %v400
    %v402 = vpop.xlane.xlu0 %401
    %vm403 = vcmp.eq.f32.partialorder %v400, %v402
    %v404 = vsel %vm403, %v399, inf
    %405 = vmin.xlane.f32.xlu0 %v404
    %v406 = vpop.xlane.xlu0 %405
    %v407 = vcvt.f32.s32 %v406
    %v408 = vcvt.f32.s32 %v402
    %v409 = vshll.u32 %v408, 16
    %v410 = vadd.s32 %v409, %v407
    %vm411 = vcmp.eq.s32.totalorder %v390, %v410
    %v412 = vsel %vm411, %v388, 0.0
    %v413 = vsel %vm411, -inf, %v388
    %v414 = vsel %vm377, %v413, -inf
    %415 = vmax.xlane.f32.xlu0 %v414
    %v416 = vpop.xlane.xlu0 %415
    %vm417 = vcmp.ge.f32.partialorder %v413, %v416
    %v418 = vsel %vm417, %v390, 4
    %v419 = vsel %vm377, %v418, 2147483647
    %v420 = vand.u32 %v419, 65535
    %v421 = vshra.s32 %v419, 16
    %v422 = vcvt.s32.f32 %v420
    %v423 = vcvt.s32.f32 %v421
    %424 = vmin.xlane.f32.xlu0 %v423
    %v425 = vpop.xlane.xlu0 %424
    %vm426 = vcmp.eq.f32.partialorder %v423, %v425
    %v427 = vsel %vm426, %v422, inf
    %428 = vmin.xlane.f32.xlu0 %v427
    %v429 = vpop.xlane.xlu0 %428
    %v430 = vcvt.f32.s32 %v429
    %v431 = vcvt.f32.s32 %v425
    %v432 = vshll.u32 %v431, 16
    %v433 = vadd.s32 %v432, %v430
    %vm434 = vcmp.eq.s32.totalorder %v390, %v433
    %v435 = vsel %vm434, %v388, %v412
    %v436 = vsel %vm377, %v435, 0.0
    %437 = vadd.xlane.f32.xlu0 %v436
    %v438 = vpop.xlane.xlu0 %437
    %v439 = vadd.f32 %v438, 1e-06
    %v440 = vrcp.pop %v439
    %v441 = vmul.f32 %v435, %v440
    %443 = vset.pattern.permute.xlu0 0
    %444 = vperm.xlu0 %443, %v441
    %v445 = vpop.permute.xlu0 %444
    %v447 = vmul.f32 %v445, %v232
    %448 = vset.pattern.permute.xlu0 1
    %449 = vperm.xlu0 %448, %v441
    %v450 = vpop.permute.xlu0 %449
    %v452 = vmul.f32 %v450, %v234
    %v453 = vadd.f32 %v447, %v452
    %454 = vset.pattern.permute.xlu0 2
    %455 = vperm.xlu0 %454, %v441
    %v456 = vpop.permute.xlu0 %455
    %v458 = vmul.f32 %v456, %v303
    %v459 = vadd.f32 %v453, %v458
    %460 = vset.pattern.permute.xlu0 3
    %461 = vperm.xlu0 %460, %v441
    %v462 = vpop.permute.xlu0 %461
    %v464 = vmul.f32 %v462, %v305
    %v465 = vadd.f32 %v459, %v464
    %466 = vst [vmem:[#allocation7] sm:$0xff] %v465
    // Predicated region
    $region22: #{tpu_custom_call.1} parent=1 // pred_check
      _
    $region23: #{tpu_custom_call.1} parent=1 // pred_check_branch
      %468 = sbr.rel (0) target = $region25
    $region24: #{tpu_custom_call.1} parent=1 // pred_region
      %s470 = ssub.s32 128, 128
      %471 = vsyncadd [#allocation4], %s470
      %s473 = sshll.u32 [#allocation7], 4
      %s474 = int_to_ptr.vmem [resolvable:$true] %s473
      %476 = dma.vmem_to_hbm [thread:$0]  %s474, 128, %s3, [#allocation4]
    $region25: #{tpu_custom_call.1} parent=1 // pred_fallthru
      _
    // Predicated region
    $region26: #{tpu_custom_call.1} parent=1 // pred_check
      _
    $region27: #{tpu_custom_call.1} parent=1 // pred_check_branch
      %478 = sbr.rel (0) target = $region29
    $region28: #{tpu_custom_call.1} parent=1 // pred_region
      %479 = dma.done [#allocation4], 128
    $region29: #{tpu_custom_call.1} parent=1 // pred_fallthru
      _
    %480 = vsyncpa [#allocation3], 1
    %481 = vsyncpa [#allocation6], 1
    %482 = vsyncpa [#allocation4], 1

</llo_original>
